<compile_context>
chip_gen: v5e
topology: v5e:2x2
jax: 0.10.0
libtpu: 0.0.40
codegen_flags: <defaults>
</compile_context>

<pallas_src>
import jax
import jax.numpy as jnp
from jax import lax
from jax.experimental import pallas as pl
from jax.experimental.pallas import tpu as pltpu

VOCAB = 64          # vocb_size
CONTEXT = 2         # context_size
N_DIM = 16          # n_dim
HIDDEN = 128
LANE = 128          # vreg lane width


def ngram_kernel(idx_ref, tbl_ref, b1_ref, w2_ref, b2_ref, o_ref):
    """One batch tile: (TB, CONTEXT) indices -> (TB, VOCAB_PAD) log-probs."""
    tb = idx_ref.shape[0]
    krows = tbl_ref.shape[0]                       # CONTEXT * VOCAB (= 128)

    # --- embedding gather + linear1 fused: multi-hot @ precomputed table ---
    idx = idx_ref[...]                             # (TB, CONTEXT) int32, one load
    lane_id = lax.broadcasted_iota(jnp.int32, (tb, krows), 1)
    mh = jnp.zeros((tb, krows), jnp.float32)
    for i in range(CONTEXT):                       # static, tiny trip count
        tgt = idx[:, i:i + 1] + i * VOCAB          # (TB, 1) column target
        mh = mh + (lane_id == tgt).astype(jnp.float32)

    # h = relu(T_0[idx_0] + T_1[idx_1] + b1) via one (TB,128)@(128,128) matmul
    h = jnp.dot(mh, tbl_ref[...], preferred_element_type=jnp.float32)
    h = jnp.maximum(h + b1_ref[...], 0.0)          # (TB, HIDDEN)

    # --- linear2 (vocab padded to lane width; pad columns biased to -1e30) ---
    logits = jnp.dot(h, w2_ref[...], preferred_element_type=jnp.float32)
    logits = logits + b2_ref[...]                  # (TB, VOCAB_PAD)

    # --- log_softmax over the (padded) vocab axis ---
    m = jnp.max(logits, axis=1, keepdims=True)     # pad lanes are -1e30 -> ignored
    z = logits - m
    lse = jnp.log(jnp.sum(jnp.exp(z), axis=1, keepdims=True))
    o_ref[...] = z - lse


def ngram_forward(x_idx, emb, w1, b1, w2, b2, *, block_b=128):
    """x_idx: (B, CONTEXT) int32. Returns (B, VOCAB) f32 log-probs.

    Weights use the (in, out) layout, i.e. the transpose of PyTorch's (out, in).
    """
    B = x_idx.shape[0]
    vocab_pad = ((VOCAB + LANE - 1) // LANE) * LANE            # 128

    # Precompute fused per-slot tables: T_i = emb @ W1[i*N_DIM:(i+1)*N_DIM, :]
    w1_slots = w1.reshape(CONTEXT, N_DIM, HIDDEN)
    table = jnp.concatenate(
        [emb @ w1_slots[i] for i in range(CONTEXT)], axis=0
    ).astype(jnp.float32)                                      # (CONTEXT*VOCAB, HIDDEN)

    # Lane-dense second linear: pad output dim 64 -> 128. Padded bias lanes get
    # -1e30 so their logits vanish under log-softmax (exp underflows to 0).
    w2p = jnp.zeros((HIDDEN, vocab_pad), jnp.float32).at[:, :VOCAB].set(w2)
    b2p = jnp.full((1, vocab_pad), -1e30, jnp.float32).at[:, :VOCAB].set(
        b2.reshape(1, VOCAB))
    b1r = b1.reshape(1, HIDDEN).astype(jnp.float32)

    # Pad batch to a multiple of the tile (pad rows use valid index 0).
    b_pad = ((B + block_b - 1) // block_b) * block_b
    idx_p = jnp.zeros((b_pad, CONTEXT), jnp.int32).at[:B].set(
        x_idx.astype(jnp.int32))

    grid = (b_pad // block_b,)
    out = pl.pallas_call(
        ngram_kernel,
        out_shape=jax.ShapeDtypeStruct((b_pad, vocab_pad), jnp.float32),
        grid_spec=pltpu.PrefetchScalarGridSpec(
            num_scalar_prefetch=0,
            grid=grid,
            in_specs=[
                pl.BlockSpec((block_b, CONTEXT), lambda b: (b, 0)),         # indices
                pl.BlockSpec((CONTEXT * VOCAB, HIDDEN), lambda b: (0, 0)),  # fused table
                pl.BlockSpec((1, HIDDEN), lambda b: (0, 0)),                # b1
                pl.BlockSpec((HIDDEN, vocab_pad), lambda b: (0, 0)),        # W2 (padded)
                pl.BlockSpec((1, vocab_pad), lambda b: (0, 0)),             # b2 (padded)
            ],
            out_specs=pl.BlockSpec((block_b, vocab_pad), lambda b: (b, 0)),
        ),
        compiler_params=pltpu.CompilerParams(
            dimension_semantics=("parallel",)),   # shard batch tiles across TCs (v7x)
    )(idx_p, table, b1r, w2p, b2p)

    return out[:B, :VOCAB]


def _reference(x_idx, emb, w1, b1, w2, b2):
    flat = emb[x_idx].reshape(x_idx.shape[0], -1)     # (B, CONTEXT*N_DIM)
    h = jnp.maximum(flat @ w1 + b1, 0.0)
    logits = h @ w2 + b2
    return jax.nn.log_softmax(logits, axis=1)


if __name__ == "__main__":
    key = jax.random.PRNGKey(0)
    k_emb, k_w1, k_b1, k_w2, k_b2, k_x = jax.random.split(key, 6)

    # Deterministic parameter init (shapes from module __init__).
    emb = jax.random.normal(k_emb, (VOCAB, N_DIM), dtype=jnp.float32)
    # Linear weights stored as (in, out) == PyTorch weight.T
    w1 = 0.1 * jax.random.normal(k_w1, (CONTEXT * N_DIM, HIDDEN), dtype=jnp.float32)
    b1 = 0.1 * jax.random.normal(k_b1, (1, HIDDEN), dtype=jnp.float32)
    w2 = 0.1 * jax.random.normal(k_w2, (HIDDEN, VOCAB), dtype=jnp.float32)
    b2 = 0.1 * jax.random.normal(k_b2, (1, VOCAB), dtype=jnp.float32)

    # Batched input: B contexts of context_size word indices (B not a multiple
    # of the tile, to exercise the batch-padding / slicing path).
    B = 200
    x_idx = jax.random.randint(k_x, (B, CONTEXT), 0, VOCAB, dtype=jnp.int32)

    log_prob = ngram_forward(x_idx, emb, w1, b1, w2, b2, block_b=128)
    log_prob = jax.block_until_ready(log_prob)

    ref = _reference(x_idx, emb, w1, b1, w2, b2)
    assert log_prob.shape == (B, VOCAB)
    assert jnp.allclose(log_prob, ref, atol=1e-4, rtol=1e-4), (
        float(jnp.max(jnp.abs(log_prob - ref))))

    print("KERNEL_OK")
</pallas_src>

<mosaic_0001>
module attributes {stable_mosaic.version = 11 : i64} {
  func.func @ngram_kernel(%arg0: i32, %arg1: memref<128x2xi32, #tpu.memory_space<vmem>>, %arg2: memref<128x128xf32, #tpu.memory_space<vmem>>, %arg3: memref<1x128xf32, #tpu.memory_space<vmem>>, %arg4: memref<128x128xf32, #tpu.memory_space<vmem>>, %arg5: memref<1x128xf32, #tpu.memory_space<vmem>>, %arg6: memref<128x128xf32, #tpu.memory_space<vmem>>) attributes {dimension_semantics = [#tpu.dimension_semantics<parallel>], iteration_bounds = array<i64: 2>, scalar_prefetch = 0 : i64, scratch_operands = 0 : i64, tpu.core_type = #tpu.core_type<tc>, window_params = [{transform_indices = @transform_0, window_bounds = array<i64: 128, 2>}, {pipeline_mode = #tpu.pipeline_mode<synchronous>, transform_indices = @transform_1, window_bounds = array<i64: 128, 128>}, {pipeline_mode = #tpu.pipeline_mode<synchronous>, transform_indices = @transform_2, window_bounds = array<i64: 1, 128>}, {pipeline_mode = #tpu.pipeline_mode<synchronous>, transform_indices = @transform_3, window_bounds = array<i64: 128, 128>}, {pipeline_mode = #tpu.pipeline_mode<synchronous>, transform_indices = @transform_4, window_bounds = array<i64: 1, 128>}, {transform_indices = @transform_5, window_bounds = array<i64: 128, 128>}]} {
    %c0 = arith.constant 0 : index
    %c0_0 = arith.constant 0 : index
    %0 = vector.load %arg1[%c0, %c0_0] : memref<128x2xi32, #tpu.memory_space<vmem>>, vector<128x2xi32>
    %1 = tpu.iota {dimensions = array<i32: 1>} : vector<128x128xi32>
    %cst = arith.constant 0.000000e+00 : f32
    %2 = vector.broadcast %cst : f32 to vector<128x128xf32>
    %3 = vector.extract_strided_slice %0 {offsets = [0, 0], sizes = [128, 1], strides = [1, 1]} : vector<128x2xi32> to vector<128x1xi32>
    %c0_i32 = arith.constant 0 : i32
    %4 = vector.broadcast %c0_i32 : i32 to vector<128x1xi32>
    %5 = arith.addi %3, %4 : vector<128x1xi32>
    %6 = vector.broadcast %5 : vector<128x1xi32> to vector<128x128xi32>
    %7 = arith.cmpi eq, %1, %6 : vector<128x128xi32>
    %8 = arith.extui %7 : vector<128x128xi1> to vector<128x128xi32>
    %9 = arith.sitofp %8 : vector<128x128xi32> to vector<128x128xf32>
    %10 = arith.addf %2, %9 : vector<128x128xf32>
    %11 = vector.extract_strided_slice %0 {offsets = [0, 1], sizes = [128, 1], strides = [1, 1]} : vector<128x2xi32> to vector<128x1xi32>
    %c64_i32 = arith.constant 64 : i32
    %12 = vector.broadcast %c64_i32 : i32 to vector<128x1xi32>
    %13 = arith.addi %11, %12 : vector<128x1xi32>
    %14 = vector.broadcast %13 : vector<128x1xi32> to vector<128x128xi32>
    %15 = arith.cmpi eq, %1, %14 : vector<128x128xi32>
    %16 = arith.extui %15 : vector<128x128xi1> to vector<128x128xi32>
    %17 = arith.sitofp %16 : vector<128x128xi32> to vector<128x128xf32>
    %18 = arith.addf %10, %17 : vector<128x128xf32>
    %c0_1 = arith.constant 0 : index
    %c0_2 = arith.constant 0 : index
    %19 = vector.load %arg2[%c0_1, %c0_2] : memref<128x128xf32, #tpu.memory_space<vmem>>, vector<128x128xf32>
    %cst_3 = arith.constant dense<0.000000e+00> : vector<128x128xf32>
    %20 = tpu.matmul %18, %19, %cst_3 {dimension_numbers = #tpu.dot_dimension_numbers<[1], [0], [0], [1], [0, 0, 1, 1], [], []>} : vector<128x128xf32>, vector<128x128xf32>, vector<128x128xf32> -> vector<128x128xf32>
    %c0_4 = arith.constant 0 : index
    %c0_5 = arith.constant 0 : index
    %21 = vector.load %arg3[%c0_4, %c0_5] : memref<1x128xf32, #tpu.memory_space<vmem>>, vector<1x128xf32>
    %22 = vector.broadcast %21 : vector<1x128xf32> to vector<128x128xf32>
    %23 = arith.addf %20, %22 : vector<128x128xf32>
    %cst_6 = arith.constant 0.000000e+00 : f32
    %24 = vector.broadcast %cst_6 : f32 to vector<128x128xf32>
    %25 = arith.maximumf %23, %24 : vector<128x128xf32>
    %c0_7 = arith.constant 0 : index
    %c0_8 = arith.constant 0 : index
    %26 = vector.load %arg4[%c0_7, %c0_8] : memref<128x128xf32, #tpu.memory_space<vmem>>, vector<128x128xf32>
    %cst_9 = arith.constant dense<0.000000e+00> : vector<128x128xf32>
    %27 = tpu.matmul %25, %26, %cst_9 {dimension_numbers = #tpu.dot_dimension_numbers<[1], [0], [0], [1], [0, 0, 1, 1], [], []>} : vector<128x128xf32>, vector<128x128xf32>, vector<128x128xf32> -> vector<128x128xf32>
    %c0_10 = arith.constant 0 : index
    %c0_11 = arith.constant 0 : index
    %28 = vector.load %arg5[%c0_10, %c0_11] : memref<1x128xf32, #tpu.memory_space<vmem>>, vector<1x128xf32>
    %29 = vector.broadcast %28 : vector<1x128xf32> to vector<128x128xf32>
    %30 = arith.addf %27, %29 : vector<128x128xf32>
    %cst_12 = arith.constant dense<0xFF800000> : vector<128xf32>
    %31 = vector.multi_reduction <maximumf>, %30, %cst_12 [1] : vector<128x128xf32> to vector<128xf32>
    %32 = vector.shape_cast %31 : vector<128xf32> to vector<128x1xf32>
    %33 = vector.broadcast %32 : vector<128x1xf32> to vector<128x128xf32>
    %34 = arith.subf %30, %33 : vector<128x128xf32>
    %35 = math.exp %34 : vector<128x128xf32>
    %cst_13 = arith.constant dense<0.000000e+00> : vector<128xf32>
    %36 = vector.multi_reduction <add>, %35, %cst_13 [1] : vector<128x128xf32> to vector<128xf32>
    %37 = vector.shape_cast %36 : vector<128xf32> to vector<128x1xf32>
    %38 = math.log %37 : vector<128x1xf32>
    %39 = vector.broadcast %38 : vector<128x1xf32> to vector<128x128xf32>
    %40 = arith.subf %34, %39 : vector<128x128xf32>
    %c0_14 = arith.constant 0 : index
    %c0_15 = arith.constant 0 : index
    %41 = vector.load %arg6[%c0_14, %c0_15] : memref<128x128xf32, #tpu.memory_space<vmem>>, vector<128x128xf32>
    tpu.vector_store %arg6[%c0_14, %c0_15], %40 {strides = array<i32>} : memref<128x128xf32, #tpu.memory_space<vmem>>, vector<128x128xf32>,
    return
  }
  func.func @transform_0(%arg0: i32) -> (i32, i32) {
    %c0_i32 = arith.constant 0 : i32
    %c0_i32_0 = arith.constant 0 : i32
    return %arg0, %c0_i32 : i32, i32
  }
  func.func @transform_1(%arg0: i32) -> (i32, i32) {
    %c0_i32 = arith.constant 0 : i32
    %c0_i32_0 = arith.constant 0 : i32
    %c0_i32_1 = arith.constant 0 : i32
    return %c0_i32, %c0_i32_0 : i32, i32
  }
  func.func @transform_2(%arg0: i32) -> (i32, i32) {
    %c0_i32 = arith.constant 0 : i32
    %c0_i32_0 = arith.constant 0 : i32
    %c0_i32_1 = arith.constant 0 : i32
    return %c0_i32, %c0_i32_0 : i32, i32
  }
  func.func @transform_3(%arg0: i32) -> (i32, i32) {
    %c0_i32 = arith.constant 0 : i32
    %c0_i32_0 = arith.constant 0 : i32
    %c0_i32_1 = arith.constant 0 : i32
    return %c0_i32, %c0_i32_0 : i32, i32
  }
  func.func @transform_4(%arg0: i32) -> (i32, i32) {
    %c0_i32 = arith.constant 0 : i32
    %c0_i32_0 = arith.constant 0 : i32
    %c0_i32_1 = arith.constant 0 : i32
    return %c0_i32, %c0_i32_0 : i32, i32
  }
  func.func @transform_5(%arg0: i32) -> (i32, i32) {
    %c0_i32 = arith.constant 0 : i32
    %c0_i32_0 = arith.constant 0 : i32
    return %arg0, %c0_i32 : i32, i32
  }
}

</mosaic_0001>

<llo_original>
// kernel: tpu_custom_call.1
$region0: #{tpu_custom_call.1}
  #allocation0 [shape = 'u32[]', space=smem, size = 0x4, offset = 0x4, fixed_abs, tag = 'smem constant byte address 0x4 - core index']
  #allocation1 [shape = 'u32[72,128]{1,0:T(1,128)}', space=vmem, size = 0x9000, scoped, tag = 'internal scratch']
  %s0 = inlined_call_operand.vmem [shape: s32[256,2], index: 0, kind: input, shape index: {}]
  %s1 = inlined_call_operand.vmem [shape: f32[128,128], index: 1, kind: input, shape index: {}]
  %s2 = inlined_call_operand.vmem [shape: f32[1,128], index: 2, kind: input, shape index: {}]
  %s3 = inlined_call_operand.vmem [shape: f32[128,128], index: 3, kind: input, shape index: {}]
  %s4 = inlined_call_operand.vmem [shape: f32[1,128], index: 4, kind: input, shape index: {}]
  %s5 = inlined_call_operand.hbm [shape: f32[256,128], index: 5, kind: output, shape index: {}]
  %s6 = sld [smem:[#allocation0]]
  $region53: #{tpu_custom_call.1} parent=0
    _
  %s8 = ssub.s32 1, %s6
  %s9 = scalar_select 0, %s8, %s6
  $region1: #{tpu_custom_call.1} parent=0
    #allocation2 [shape = 'u8[131072]{0}', space=vmem, size = 0x20000, scoped, tag = 'output window, operand 0']
    #allocation3 [shape = 's32[2]{0}', space=sflag, size = 0x8, scoped, tag = 'scoped memory for tpu_custom_call.1']
    %10 = vsyncpa [#allocation3], 0
    %s11 = scalar_lea.sflag [#allocation3], 1
    %12 = vsyncpa %s11, 0
    loop: start=0, step=1, limit=4
    $region2: #{tpu_custom_call.1} parent=1 // loop_pre_header
      _
    $region3: #{tpu_custom_call.1} parent=1 // loop_header
      %s14 = sphi 0, %s18
      %p15 = scmp.ge.s32.totalorder %s14, 4
      %s24 = sphi 0, %s26
      %s27 = sphi 0, %s24
      %s28 = sphi 0, %s27
      %s44 = sphi 0, %s28
      %s48 = sphi 0, %s48
      %s50 = sphi 0, %s48
      %s51 = sphi 0, %s50
      %s65 = sphi 0, %s51
      %s69 = sphi 0, %s69
      %s71 = sphi 0, %s69
      %s72 = sphi 0, %s71
      %s86 = sphi 0, %s72
      %s90 = sphi 0, %s90
      %s92 = sphi 0, %s90
      %s93 = sphi 0, %s92
      %s107 = sphi 0, %s93
      %s111 = sphi 0, %s111
      %s113 = sphi 0, %s111
      %s114 = sphi 0, %s113
      %s128 = sphi 0, %s114
      %s134 = sphi 0, %s136
      %s137 = sphi 0, %s134
      %s138 = sphi 0, %s137
      %s154 = sphi 0, %s138
    $region4: #{tpu_custom_call.1} parent=1 // loop_header_branch
      %17 = sbr.rel (%p15) target = $region8
    $region5: #{tpu_custom_call.1} parent=1 // loop_body
      %s19 = ssub.s32 %s14, 1
      %s20 = ssub.s32 %s14, 2
      %s21 = sadd.s32 %s14, 1
      %s22 = ssub.s32 %s14, %s21
      %p23 = scmp.eq.s32.totalorder %s22, 0
      %s25 = sadd.s32 %s24, 1
      %s26 = scalar_select %p23, %s24, %s25
      %p29 = pneg %p23
      %p30 = scmp.eq.s32.totalorder %s14, 1
      %p31 = por %p29, %p30
      %p32 = scmp.ne.s32.totalorder %s24, %s27
      %p33 = scmp.eq.s32.totalorder %s14, 0
      %p34 = por %p32, %p33
      %p35 = scmp.ne.s32.totalorder %s24, %s27
      %p36 = scmp.eq.s32.totalorder %s19, 1
      %p37 = por %p35, %p36
      %p38 = scmp.ne.s32.totalorder %s27, %s28
      %p39 = scmp.eq.s32.totalorder %s19, 0
      %p40 = por %p38, %p39
      %p41 = scmp.ne.s32.totalorder %s27, %s28
      %p42 = scmp.eq.s32.totalorder %s20, 1
      %p43 = por %p41, %p42
      %p45 = scmp.ne.s32.totalorder %s28, %s44
      %p46 = scmp.eq.s32.totalorder %s20, 0
      %p47 = por %p45, %p46
      %s49 = sadd.s32 %s48, 1
      %p52 = scmp.eq.s32.totalorder %s14, 1
      %p53 = scmp.ne.s32.totalorder %s48, %s50
      %p54 = scmp.eq.s32.totalorder %s14, 0
      %p55 = por %p53, %p54
      %p56 = scmp.ne.s32.totalorder %s48, %s50
      %p57 = scmp.eq.s32.totalorder %s19, 1
      %p58 = por %p56, %p57
      %p59 = scmp.ne.s32.totalorder %s50, %s51
      %p60 = scmp.eq.s32.totalorder %s19, 0
      %p61 = por %p59, %p60
      %p62 = scmp.ne.s32.totalorder %s50, %s51
      %p63 = scmp.eq.s32.totalorder %s20, 1
      %p64 = por %p62, %p63
      %p66 = scmp.ne.s32.totalorder %s51, %s65
      %p67 = scmp.eq.s32.totalorder %s20, 0
      %p68 = por %p66, %p67
      %s70 = sadd.s32 %s69, 1
      %p73 = scmp.eq.s32.totalorder %s14, 1
      %p74 = scmp.ne.s32.totalorder %s69, %s71
      %p75 = scmp.eq.s32.totalorder %s14, 0
      %p76 = por %p74, %p75
      %p77 = scmp.ne.s32.totalorder %s69, %s71
      %p78 = scmp.eq.s32.totalorder %s19, 1
      %p79 = por %p77, %p78
      %p80 = scmp.ne.s32.totalorder %s71, %s72
      %p81 = scmp.eq.s32.totalorder %s19, 0
      %p82 = por %p80, %p81
      %p83 = scmp.ne.s32.totalorder %s71, %s72
      %p84 = scmp.eq.s32.totalorder %s20, 1
      %p85 = por %p83, %p84
      %p87 = scmp.ne.s32.totalorder %s72, %s86
      %p88 = scmp.eq.s32.totalorder %s20, 0
      %p89 = por %p87, %p88
      %s91 = sadd.s32 %s90, 1
      %p94 = scmp.eq.s32.totalorder %s14, 1
      %p95 = scmp.ne.s32.totalorder %s90, %s92
      %p96 = scmp.eq.s32.totalorder %s14, 0
      %p97 = por %p95, %p96
      %p98 = scmp.ne.s32.totalorder %s90, %s92
      %p99 = scmp.eq.s32.totalorder %s19, 1
      %p100 = por %p98, %p99
      %p101 = scmp.ne.s32.totalorder %s92, %s93
      %p102 = scmp.eq.s32.totalorder %s19, 0
      %p103 = por %p101, %p102
      %p104 = scmp.ne.s32.totalorder %s92, %s93
      %p105 = scmp.eq.s32.totalorder %s20, 1
      %p106 = por %p104, %p105
      %p108 = scmp.ne.s32.totalorder %s93, %s107
      %p109 = scmp.eq.s32.totalorder %s20, 0
      %p110 = por %p108, %p109
      %s112 = sadd.s32 %s111, 1
      %p115 = scmp.eq.s32.totalorder %s14, 1
      %p116 = scmp.ne.s32.totalorder %s111, %s113
      %p117 = scmp.eq.s32.totalorder %s14, 0
      %p118 = por %p116, %p117
      %p119 = scmp.ne.s32.totalorder %s111, %s113
      %p120 = scmp.eq.s32.totalorder %s19, 1
      %p121 = por %p119, %p120
      %p122 = scmp.ne.s32.totalorder %s113, %s114
      %p123 = scmp.eq.s32.totalorder %s19, 0
      %p124 = por %p122, %p123
      %p125 = scmp.ne.s32.totalorder %s113, %s114
      %p126 = scmp.eq.s32.totalorder %s20, 1
      %p127 = por %p125, %p126
      %p129 = scmp.ne.s32.totalorder %s114, %s128
      %p130 = scmp.eq.s32.totalorder %s20, 0
      %p131 = por %p129, %p130
      %s132 = ssub.s32 %s14, %s21
      %p133 = scmp.eq.s32.totalorder %s132, 0
      %s135 = sadd.s32 %s134, 1
      %s136 = scalar_select %p133, %s134, %s135
      %p139 = pneg %p133
      %p140 = scmp.eq.s32.totalorder %s14, 1
      %p141 = por %p139, %p140
      %p142 = scmp.ne.s32.totalorder %s134, %s137
      %p143 = scmp.eq.s32.totalorder %s14, 0
      %p144 = por %p142, %p143
      %p145 = scmp.ne.s32.totalorder %s134, %s137
      %p146 = scmp.eq.s32.totalorder %s19, 1
      %p147 = por %p145, %p146
      %p148 = scmp.ne.s32.totalorder %s137, %s138
      %p149 = scmp.eq.s32.totalorder %s19, 0
      %p150 = por %p148, %p149
      %p151 = scmp.ne.s32.totalorder %s137, %s138
      %p152 = scmp.eq.s32.totalorder %s20, 1
      %p153 = por %p151, %p152
      %p155 = scmp.ne.s32.totalorder %s138, %s154
      %p156 = scmp.eq.s32.totalorder %s20, 0
      %p157 = por %p155, %p156
      %p158 = scmp.le.s32.totalorder 1, %s14
      %p159 = scmp.lt.s32.totalorder %s14, 3
      %p160 = pnand %p158, %p159
      %p161 = pneg %p160
      // Predicated region
      $region9: #{tpu_custom_call.1} parent=5 // pred_check
        _
      $region10: #{tpu_custom_call.1} parent=5 // pred_check_branch
        %163 = sbr.rel (%p160) target = $region12
      $region11: #{tpu_custom_call.1} parent=5 // pred_region
        %s164 = ssub.s32 %s14, 1
        // Predicated region
        $region13: #{tpu_custom_call.1} parent=11 // pred_check
          %p165 = pneg %p61
        $region14: #{tpu_custom_call.1} parent=11 // pred_check_branch
          %167 = sbr.rel (%p165) target = $region16
        $region15: #{tpu_custom_call.1} parent=11 // pred_region
          _
        $region16: #{tpu_custom_call.1} parent=11 // pred_fallthru
          _
        // Predicated region
        $region17: #{tpu_custom_call.1} parent=11 // pred_check
          %p168 = pneg %p82
        $region18: #{tpu_custom_call.1} parent=11 // pred_check_branch
          %170 = sbr.rel (%p168) target = $region20
        $region19: #{tpu_custom_call.1} parent=11 // pred_region
          _
        $region20: #{tpu_custom_call.1} parent=11 // pred_fallthru
          _
        // Predicated region
        $region21: #{tpu_custom_call.1} parent=11 // pred_check
          %p171 = pneg %p103
        $region22: #{tpu_custom_call.1} parent=11 // pred_check_branch
          %173 = sbr.rel (%p171) target = $region24
        $region23: #{tpu_custom_call.1} parent=11 // pred_region
          _
        $region24: #{tpu_custom_call.1} parent=11 // pred_fallthru
          _
        // Predicated region
        $region25: #{tpu_custom_call.1} parent=11 // pred_check
          %p174 = pneg %p124
        $region26: #{tpu_custom_call.1} parent=11 // pred_check_branch
          %176 = sbr.rel (%p174) target = $region28
        $region27: #{tpu_custom_call.1} parent=11 // pred_region
          _
        $region28: #{tpu_custom_call.1} parent=11 // pred_fallthru
          _
      $region12: #{tpu_custom_call.1} parent=5 // pred_fallthru
        _
      %p177 = scmp.lt.s32.totalorder %s14, 2
      // Predicated region
      $region29: #{tpu_custom_call.1} parent=5 // pred_check
        %p178 = pneg %p177
      $region30: #{tpu_custom_call.1} parent=5 // pred_check_branch
        %180 = sbr.rel (%p178) target = $region32
      $region31: #{tpu_custom_call.1} parent=5 // pred_region
        // Predicated region
        $region33: #{tpu_custom_call.1} parent=31 // pred_check
          %p181 = pneg %p34
        $region34: #{tpu_custom_call.1} parent=31 // pred_check_branch
          %183 = sbr.rel (%p181) target = $region36
        $region35: #{tpu_custom_call.1} parent=31 // pred_region
          %s184 = smul.u32 16, %s14
          %p185 = scmp.lt.s32.totalorder %s184, 31
          %s186 = scalar_select %p185, %s184, 31
          %s187 = smul.addr %s186, 8
          %s188 = scalar_lea.vmem %s0, %s187
          %s189 = smul.u32 16, %s14
        $region36: #{tpu_custom_call.1} parent=31 // pred_fallthru
          _
      $region32: #{tpu_custom_call.1} parent=5 // pred_fallthru
        _
      %p190 = scmp.le.s32.totalorder 1, %s14
      %p191 = scmp.lt.s32.totalorder %s14, 3
      %p192 = pnand %p190, %p191
      %p193 = pneg %p192
      // Predicated region
      $region37: #{tpu_custom_call.1} parent=5 // pred_check
        _
      $region38: #{tpu_custom_call.1} parent=5 // pred_check_branch
        %195 = sbr.rel (%p192) target = $region40
      $region39: #{tpu_custom_call.1} parent=5 // pred_region
        %s196 = ssub.s32 %s14, 1
        %s197 = smul.u32 16, %s19
        %p198 = scmp.lt.s32.totalorder %s197, 31
        %s199 = scalar_select %p198, %s197, 31
        %s200 = smul.addr %s199, 8
        %s201 = scalar_lea.vmem %s0, %s200
        %p202 = pneg %p40
        %p203 = pneg %p37
        %p204 = pneg %p61
        %p205 = pneg %p58
        %p206 = pneg %p82
        %p207 = pneg %p79
        %p208 = pneg %p103
        %p209 = pneg %p100
        %p210 = pneg %p124
        %p211 = pneg %p121
        %p212 = pneg %p150
        %p213 = pneg %p147
        %s214 = sand.u32 %s137, 1
        %s215 = scalar_lea.sflag [#allocation3], %s214
        %s216 = sand.u32 %s137, 1
        %s217 = smul.addr %s216, 128
        %s218 = scalar_lea.vmem [#allocation2], %s217
        %s219 = smul.u32 16, %s19
        %p220 = scmp.lt.s32.totalorder %s219, 31
        %s221 = scalar_select %p220, %s219, 31
        %s222 = smul.addr %s221, 8
        %s223 = scalar_lea.vmem %s0, %s222
        %s224 = smul.u32 16, %s19
        %s225 = smul.u32 16, %s19
        %v226 = vld [vmem:[%s223] sm:$0xff]
        %v227 = vld [vmem:[%s223 + $0x8] sm:$0xff]
        %v228 = vld [vmem:[%s223 + $0x10] sm:$0xff]
        %v229 = vld [vmem:[%s223 + $0x18] sm:$0xff]
        %v230 = vld [vmem:[%s223 + $0x20] sm:$0xff]
        %v231 = vld [vmem:[%s223 + $0x28] sm:$0xff]
        %v232 = vld [vmem:[%s223 + $0x30] sm:$0xff]
        %v233 = vld [vmem:[%s223 + $0x38] sm:$0xff]
        %v234 = vld [vmem:[%s223 + $0x40] sm:$0xff]
        %v235 = vld [vmem:[%s223 + $0x48] sm:$0xff]
        %v236 = vld [vmem:[%s223 + $0x50] sm:$0xff]
        %v237 = vld [vmem:[%s223 + $0x58] sm:$0xff]
        %v238 = vld [vmem:[%s223 + $0x60] sm:$0xff]
        %v239 = vld [vmem:[%s223 + $0x68] sm:$0xff]
        %v240 = vld [vmem:[%s223 + $0x70] sm:$0xff]
        %v241 = vld [vmem:[%s223 + $0x78] sm:$0xff]
        %v242 = vlaneseq
        %v243 = vand.u32 %v242, 127
        %244 = vset.pattern.permute.xlu0 0
        %245 = vperm.xlu0 %244, %v226
        %v246 = vpop.permute.xlu0 %245
        %247 = vset.pattern.permute.xlu0 0
        %248 = vperm.xlu0 %247, %v227
        %v249 = vpop.permute.xlu0 %248
        %250 = vset.pattern.permute.xlu0 0
        %251 = vperm.xlu0 %250, %v228
        %v252 = vpop.permute.xlu0 %251
        %253 = vset.pattern.permute.xlu0 0
        %254 = vperm.xlu0 %253, %v229
        %v255 = vpop.permute.xlu0 %254
        %256 = vset.pattern.permute.xlu0 0
        %257 = vperm.xlu0 %256, %v230
        %v258 = vpop.permute.xlu0 %257
        %259 = vset.pattern.permute.xlu0 0
        %260 = vperm.xlu0 %259, %v231
        %v261 = vpop.permute.xlu0 %260
        %262 = vset.pattern.permute.xlu0 0
        %263 = vperm.xlu0 %262, %v232
        %v264 = vpop.permute.xlu0 %263
        %265 = vset.pattern.permute.xlu0 0
        %266 = vperm.xlu0 %265, %v233
        %v267 = vpop.permute.xlu0 %266
        %268 = vset.pattern.permute.xlu0 0
        %269 = vperm.xlu0 %268, %v234
        %v270 = vpop.permute.xlu0 %269
        %271 = vset.pattern.permute.xlu0 0
        %272 = vperm.xlu0 %271, %v235
        %v273 = vpop.permute.xlu0 %272
        %274 = vset.pattern.permute.xlu0 0
        %275 = vperm.xlu0 %274, %v236
        %v276 = vpop.permute.xlu0 %275
        %277 = vset.pattern.permute.xlu0 0
        %278 = vperm.xlu0 %277, %v237
        %v279 = vpop.permute.xlu0 %278
        %280 = vset.pattern.permute.xlu0 0
        %281 = vperm.xlu0 %280, %v238
        %v282 = vpop.permute.xlu0 %281
        %283 = vset.pattern.permute.xlu0 0
        %284 = vperm.xlu0 %283, %v239
        %v285 = vpop.permute.xlu0 %284
        %286 = vset.pattern.permute.xlu0 0
        %287 = vperm.xlu0 %286, %v240
        %v288 = vpop.permute.xlu0 %287
        %289 = vset.pattern.permute.xlu0 0
        %290 = vperm.xlu0 %289, %v241
        %v291 = vpop.permute.xlu0 %290
        %vm292 = vcmp.eq.s32.totalorder %v243, %v246
        %vm293 = vcmp.eq.s32.totalorder %v243, %v249
        %vm294 = vcmp.eq.s32.totalorder %v243, %v252
        %vm295 = vcmp.eq.s32.totalorder %v243, %v255
        %vm296 = vcmp.eq.s32.totalorder %v243, %v258
        %vm297 = vcmp.eq.s32.totalorder %v243, %v261
        %vm298 = vcmp.eq.s32.totalorder %v243, %v264
        %vm299 = vcmp.eq.s32.totalorder %v243, %v267
        %vm300 = vcmp.eq.s32.totalorder %v243, %v270
        %vm301 = vcmp.eq.s32.totalorder %v243, %v273
        %vm302 = vcmp.eq.s32.totalorder %v243, %v276
        %vm303 = vcmp.eq.s32.totalorder %v243, %v279
        %vm304 = vcmp.eq.s32.totalorder %v243, %v282
        %vm305 = vcmp.eq.s32.totalorder %v243, %v285
        %vm306 = vcmp.eq.s32.totalorder %v243, %v288
        %vm307 = vcmp.eq.s32.totalorder %v243, %v291
        %v308 = vsel %vm292, 1, 0
        %v309 = vsel %vm293, 1, 0
        %v310 = vsel %vm294, 1, 0
        %v311 = vsel %vm295, 1, 0
        %v312 = vsel %vm296, 1, 0
        %v313 = vsel %vm297, 1, 0
        %v314 = vsel %vm298, 1, 0
        %v315 = vsel %vm299, 1, 0
        %v316 = vsel %vm300, 1, 0
        %v317 = vsel %vm301, 1, 0
        %v318 = vsel %vm302, 1, 0
        %v319 = vsel %vm303, 1, 0
        %v320 = vsel %vm304, 1, 0
        %v321 = vsel %vm305, 1, 0
        %v322 = vsel %vm306, 1, 0
        %v323 = vsel %vm307, 1, 0
        %v324 = vcvt.s32.f32 %v308
        %v325 = vcvt.s32.f32 %v309
        %v326 = vcvt.s32.f32 %v310
        %v327 = vcvt.s32.f32 %v311
        %v328 = vcvt.s32.f32 %v312
        %v329 = vcvt.s32.f32 %v313
        %v330 = vcvt.s32.f32 %v314
        %v331 = vcvt.s32.f32 %v315
        %v332 = vcvt.s32.f32 %v316
        %v333 = vcvt.s32.f32 %v317
        %v334 = vcvt.s32.f32 %v318
        %v335 = vcvt.s32.f32 %v319
        %v336 = vcvt.s32.f32 %v320
        %v337 = vcvt.s32.f32 %v321
        %v338 = vcvt.s32.f32 %v322
        %v339 = vcvt.s32.f32 %v323
        %v340 = vadd.f32 %v324, 0.0
        %v341 = vadd.f32 %v325, 0.0
        %v342 = vadd.f32 %v326, 0.0
        %v343 = vadd.f32 %v327, 0.0
        %v344 = vadd.f32 %v328, 0.0
        %v345 = vadd.f32 %v329, 0.0
        %v346 = vadd.f32 %v330, 0.0
        %v347 = vadd.f32 %v331, 0.0
        %v348 = vadd.f32 %v332, 0.0
        %v349 = vadd.f32 %v333, 0.0
        %v350 = vadd.f32 %v334, 0.0
        %v351 = vadd.f32 %v335, 0.0
        %v352 = vadd.f32 %v336, 0.0
        %v353 = vadd.f32 %v337, 0.0
        %v354 = vadd.f32 %v338, 0.0
        %v355 = vadd.f32 %v339, 0.0
        %v356 = vadd.s32 %v226, 64
        %v357 = vadd.s32 %v227, 64
        %v358 = vadd.s32 %v228, 64
        %v359 = vadd.s32 %v229, 64
        %v360 = vadd.s32 %v230, 64
        %v361 = vadd.s32 %v231, 64
        %v362 = vadd.s32 %v232, 64
        %v363 = vadd.s32 %v233, 64
        %v364 = vadd.s32 %v234, 64
        %v365 = vadd.s32 %v235, 64
        %v366 = vadd.s32 %v236, 64
        %v367 = vadd.s32 %v237, 64
        %v368 = vadd.s32 %v238, 64
        %v369 = vadd.s32 %v239, 64
        %v370 = vadd.s32 %v240, 64
        %v371 = vadd.s32 %v241, 64
        %372 = vset.pattern.permute.xlu0 1
        %373 = vperm.xlu0 %372, %v356
        %v374 = vpop.permute.xlu0 %373
        %375 = vset.pattern.permute.xlu0 1
        %376 = vperm.xlu0 %375, %v357
        %v377 = vpop.permute.xlu0 %376
        %378 = vset.pattern.permute.xlu0 1
        %379 = vperm.xlu0 %378, %v358
        %v380 = vpop.permute.xlu0 %379
        %381 = vset.pattern.permute.xlu0 1
        %382 = vperm.xlu0 %381, %v359
        %v383 = vpop.permute.xlu0 %382
        %384 = vset.pattern.permute.xlu0 1
        %385 = vperm.xlu0 %384, %v360
        %v386 = vpop.permute.xlu0 %385
        %387 = vset.pattern.permute.xlu0 1
        %388 = vperm.xlu0 %387, %v361
        %v389 = vpop.permute.xlu0 %388
        %390 = vset.pattern.permute.xlu0 1
        %391 = vperm.xlu0 %390, %v362
        %v392 = vpop.permute.xlu0 %391
        %393 = vset.pattern.permute.xlu0 1
        %394 = vperm.xlu0 %393, %v363
        %v395 = vpop.permute.xlu0 %394
        %396 = vset.pattern.permute.xlu0 1
        %397 = vperm.xlu0 %396, %v364
        %v398 = vpop.permute.xlu0 %397
        %399 = vset.pattern.permute.xlu0 1
        %400 = vperm.xlu0 %399, %v365
        %v401 = vpop.permute.xlu0 %400
        %402 = vset.pattern.permute.xlu0 1
        %403 = vperm.xlu0 %402, %v366
        %v404 = vpop.permute.xlu0 %403
        %405 = vset.pattern.permute.xlu0 1
        %406 = vperm.xlu0 %405, %v367
        %v407 = vpop.permute.xlu0 %406
        %408 = vset.pattern.permute.xlu0 1
        %409 = vperm.xlu0 %408, %v368
        %v410 = vpop.permute.xlu0 %409
        %411 = vset.pattern.permute.xlu0 1
        %412 = vperm.xlu0 %411, %v369
        %v413 = vpop.permute.xlu0 %412
        %414 = vset.pattern.permute.xlu0 1
        %415 = vperm.xlu0 %414, %v370
        %v416 = vpop.permute.xlu0 %415
        %417 = vset.pattern.permute.xlu0 1
        %418 = vperm.xlu0 %417, %v371
        %v419 = vpop.permute.xlu0 %418
        %vm420 = vcmp.eq.s32.totalorder %v243, %v374
        %vm421 = vcmp.eq.s32.totalorder %v243, %v377
        %vm422 = vcmp.eq.s32.totalorder %v243, %v380
        %vm423 = vcmp.eq.s32.totalorder %v243, %v383
        %vm424 = vcmp.eq.s32.totalorder %v243, %v386
        %vm425 = vcmp.eq.s32.totalorder %v243, %v389
        %vm426 = vcmp.eq.s32.totalorder %v243, %v392
        %vm427 = vcmp.eq.s32.totalorder %v243, %v395
        %vm428 = vcmp.eq.s32.totalorder %v243, %v398
        %vm429 = vcmp.eq.s32.totalorder %v243, %v401
        %vm430 = vcmp.eq.s32.totalorder %v243, %v404
        %vm431 = vcmp.eq.s32.totalorder %v243, %v407
        %vm432 = vcmp.eq.s32.totalorder %v243, %v410
        %vm433 = vcmp.eq.s32.totalorder %v243, %v413
        %vm434 = vcmp.eq.s32.totalorder %v243, %v416
        %vm435 = vcmp.eq.s32.totalorder %v243, %v419
        %v436 = vsel %vm420, 1, 0
        %v437 = vsel %vm421, 1, 0
        %v438 = vsel %vm422, 1, 0
        %v439 = vsel %vm423, 1, 0
        %v440 = vsel %vm424, 1, 0
        %v441 = vsel %vm425, 1, 0
        %v442 = vsel %vm426, 1, 0
        %v443 = vsel %vm427, 1, 0
        %v444 = vsel %vm428, 1, 0
        %v445 = vsel %vm429, 1, 0
        %v446 = vsel %vm430, 1, 0
        %v447 = vsel %vm431, 1, 0
        %v448 = vsel %vm432, 1, 0
        %v449 = vsel %vm433, 1, 0
        %v450 = vsel %vm434, 1, 0
        %v451 = vsel %vm435, 1, 0
        %v452 = vcvt.s32.f32 %v436
        %v453 = vcvt.s32.f32 %v437
        %v454 = vcvt.s32.f32 %v438
        %v455 = vcvt.s32.f32 %v439
        %v456 = vcvt.s32.f32 %v440
        %v457 = vcvt.s32.f32 %v441
        %v458 = vcvt.s32.f32 %v442
        %v459 = vcvt.s32.f32 %v443
        %v460 = vcvt.s32.f32 %v444
        %v461 = vcvt.s32.f32 %v445
        %v462 = vcvt.s32.f32 %v446
        %v463 = vcvt.s32.f32 %v447
        %v464 = vcvt.s32.f32 %v448
        %v465 = vcvt.s32.f32 %v449
        %v466 = vcvt.s32.f32 %v450
        %v467 = vcvt.s32.f32 %v451
        %v468 = vadd.f32 %v340, %v452
        %v469 = vadd.f32 %v341, %v453
        %v470 = vadd.f32 %v342, %v454
        %v471 = vadd.f32 %v343, %v455
        %v472 = vadd.f32 %v344, %v456
        %v473 = vadd.f32 %v345, %v457
        %v474 = vadd.f32 %v346, %v458
        %v475 = vadd.f32 %v347, %v459
        %v476 = vadd.f32 %v348, %v460
        %v477 = vadd.f32 %v349, %v461
        %v478 = vadd.f32 %v350, %v462
        %v479 = vadd.f32 %v351, %v463
        %v480 = vadd.f32 %v352, %v464
        %v481 = vadd.f32 %v353, %v465
        %v482 = vadd.f32 %v354, %v466
        %v483 = vadd.f32 %v355, %v467
        %v484 = vld [vmem:[%s1] sm:$0xff]
        %v485 = vld [vmem:[%s1 + $0x8] sm:$0xff]
        %v486 = vld [vmem:[%s1 + $0x10] sm:$0xff]
        %v487 = vld [vmem:[%s1 + $0x18] sm:$0xff]
        %v488 = vld [vmem:[%s1 + $0x20] sm:$0xff]
        %v489 = vld [vmem:[%s1 + $0x28] sm:$0xff]
        %v490 = vld [vmem:[%s1 + $0x30] sm:$0xff]
        %v491 = vld [vmem:[%s1 + $0x38] sm:$0xff]
        %v492 = vld [vmem:[%s1 + $0x40] sm:$0xff]
        %v493 = vld [vmem:[%s1 + $0x48] sm:$0xff]
        %v494 = vld [vmem:[%s1 + $0x50] sm:$0xff]
        %v495 = vld [vmem:[%s1 + $0x58] sm:$0xff]
        %v496 = vld [vmem:[%s1 + $0x60] sm:$0xff]
        %v497 = vld [vmem:[%s1 + $0x68] sm:$0xff]
        %v498 = vld [vmem:[%s1 + $0x70] sm:$0xff]
        %v499 = vld [vmem:[%s1 + $0x78] sm:$0xff]
        %v500 = vld [vmem:[%s2] sm:$0x1]
        %v502 = vperm.slane %v500, 0
        %504 = vmatpush.msra.mxu0 %v499
        %505 = vmatpush.msra.mxu0 %v498
        %506 = vmatpush.msra.mxu0 %v497
        %507 = vmatpush.msra.mxu0 %v496
        %508 = vmatpush.msra.mxu0 %v495
        %509 = vmatpush.msra.mxu0 %v494
        %510 = vmatpush.msra.mxu0 %v493
        %511 = vmatpush.msra.mxu0 %v492
        %512 = vmatpush.msra.mxu0 %v491
        %513 = vmatpush.msra.mxu0 %v490
        %514 = vmatpush.msra.mxu0 %v489
        %515 = vmatpush.msra.mxu0 %v488
        %516 = vmatpush.msra.mxu0 %v487
        %517 = vmatpush.msra.mxu0 %v486
        %518 = vmatpush.msra.mxu0 %v485
        %519 = vmatpush.msra.mxu0 %v484
        %520 = vmatmul.f32.gmra.mxu0 %v468
        %v521 = vpop.f32.mrf.mxu0
        %v522 = vadd.f32 %v502, %v521
        %523 = vmatmul.f32.gmra.mxu0 %v469
        %v524 = vpop.f32.mrf.mxu0
        %v525 = vadd.f32 %v502, %v524
        %526 = vmatmul.f32.gmra.mxu0 %v470
        %v527 = vpop.f32.mrf.mxu0
        %v528 = vadd.f32 %v502, %v527
        %529 = vmatmul.f32.gmra.mxu0 %v471
        %v530 = vpop.f32.mrf.mxu0
        %v531 = vadd.f32 %v502, %v530
        %532 = vmatmul.f32.gmra.mxu0 %v472
        %v533 = vpop.f32.mrf.mxu0
        %v534 = vadd.f32 %v502, %v533
        %535 = vmatmul.f32.gmra.mxu0 %v473
        %v536 = vpop.f32.mrf.mxu0
        %v537 = vadd.f32 %v502, %v536
        %538 = vmatmul.f32.gmra.mxu0 %v474
        %v539 = vpop.f32.mrf.mxu0
        %v540 = vadd.f32 %v502, %v539
        %541 = vmatmul.f32.gmra.mxu0 %v475
        %v542 = vpop.f32.mrf.mxu0
        %v543 = vadd.f32 %v502, %v542
        %544 = vmatmul.f32.gmra.mxu0 %v476
        %v545 = vpop.f32.mrf.mxu0
        %v546 = vadd.f32 %v502, %v545
        %547 = vmatmul.f32.gmra.mxu0 %v477
        %v548 = vpop.f32.mrf.mxu0
        %v549 = vadd.f32 %v502, %v548
        %550 = vmatmul.f32.gmra.mxu0 %v478
        %v551 = vpop.f32.mrf.mxu0
        %v552 = vadd.f32 %v502, %v551
        %553 = vmatmul.f32.gmra.mxu0 %v479
        %v554 = vpop.f32.mrf.mxu0
        %v555 = vadd.f32 %v502, %v554
        %556 = vmatmul.f32.gmra.mxu0 %v480
        %v557 = vpop.f32.mrf.mxu0
        %v558 = vadd.f32 %v502, %v557
        %559 = vmatmul.f32.gmra.mxu0 %v481
        %v560 = vpop.f32.mrf.mxu0
        %v561 = vadd.f32 %v502, %v560
        %562 = vmatmul.f32.gmra.mxu0 %v482
        %v563 = vpop.f32.mrf.mxu0
        %v564 = vadd.f32 %v502, %v563
        %565 = vmatmul.f32.gmra.mxu0 %v483
        %v566 = vpop.f32.mrf.mxu0
        %v567 = vadd.f32 %v502, %v566
        %568 = vdwg.mxu0
        %v569 = vmax.f32 %v522, 0.0
        %v570 = vmax.f32 %v525, 0.0
        %v571 = vmax.f32 %v528, 0.0
        %v572 = vmax.f32 %v531, 0.0
        %v573 = vmax.f32 %v534, 0.0
        %v574 = vmax.f32 %v537, 0.0
        %v575 = vmax.f32 %v540, 0.0
        %v576 = vmax.f32 %v543, 0.0
        %v577 = vmax.f32 %v546, 0.0
        %v578 = vmax.f32 %v549, 0.0
        %v579 = vmax.f32 %v552, 0.0
        %v580 = vmax.f32 %v555, 0.0
        %v581 = vmax.f32 %v558, 0.0
        %v582 = vmax.f32 %v561, 0.0
        %v583 = vmax.f32 %v564, 0.0
        %v584 = vmax.f32 %v567, 0.0
        %v585 = vld [vmem:[%s3] sm:$0xff]
        %v586 = vld [vmem:[%s3 + $0x8] sm:$0xff]
        %v587 = vld [vmem:[%s3 + $0x10] sm:$0xff]
        %v588 = vld [vmem:[%s3 + $0x18] sm:$0xff]
        %v589 = vld [vmem:[%s3 + $0x20] sm:$0xff]
        %v590 = vld [vmem:[%s3 + $0x28] sm:$0xff]
        %v591 = vld [vmem:[%s3 + $0x30] sm:$0xff]
        %v592 = vld [vmem:[%s3 + $0x38] sm:$0xff]
        %v593 = vld [vmem:[%s3 + $0x40] sm:$0xff]
        %v594 = vld [vmem:[%s3 + $0x48] sm:$0xff]
        %v595 = vld [vmem:[%s3 + $0x50] sm:$0xff]
        %v596 = vld [vmem:[%s3 + $0x58] sm:$0xff]
        %v597 = vld [vmem:[%s3 + $0x60] sm:$0xff]
        %v598 = vld [vmem:[%s3 + $0x68] sm:$0xff]
        %v599 = vld [vmem:[%s3 + $0x70] sm:$0xff]
        %v600 = vld [vmem:[%s3 + $0x78] sm:$0xff]
        %v601 = vld [vmem:[%s4] sm:$0x1]
        %v603 = vperm.slane %v601, 0
        %605 = vmatpush.msra.mxu0 %v600
        %606 = vmatpush.msra.mxu0 %v599
        %607 = vmatpush.msra.mxu0 %v598
        %608 = vmatpush.msra.mxu0 %v597
        %609 = vmatpush.msra.mxu0 %v596
        %610 = vmatpush.msra.mxu0 %v595
        %611 = vmatpush.msra.mxu0 %v594
        %612 = vmatpush.msra.mxu0 %v593
        %613 = vmatpush.msra.mxu0 %v592
        %614 = vmatpush.msra.mxu0 %v591
        %615 = vmatpush.msra.mxu0 %v590
        %616 = vmatpush.msra.mxu0 %v589
        %617 = vmatpush.msra.mxu0 %v588
        %618 = vmatpush.msra.mxu0 %v587
        %619 = vmatpush.msra.mxu0 %v586
        %620 = vmatpush.msra.mxu0 %v585
        %621 = vmatmul.f32.gmra.mxu0 %v569
        %v622 = vpop.f32.mrf.mxu0
        %v623 = vadd.f32 %v603, %v622
        %624 = vmatmul.f32.gmra.mxu0 %v570
        %v625 = vpop.f32.mrf.mxu0
        %v626 = vadd.f32 %v603, %v625
        %627 = vmatmul.f32.gmra.mxu0 %v571
        %v628 = vpop.f32.mrf.mxu0
        %v629 = vadd.f32 %v603, %v628
        %630 = vmatmul.f32.gmra.mxu0 %v572
        %v631 = vpop.f32.mrf.mxu0
        %v632 = vadd.f32 %v603, %v631
        %633 = vmatmul.f32.gmra.mxu0 %v573
        %v634 = vpop.f32.mrf.mxu0
        %v635 = vadd.f32 %v603, %v634
        %636 = vmatmul.f32.gmra.mxu0 %v574
        %v637 = vpop.f32.mrf.mxu0
        %v638 = vadd.f32 %v603, %v637
        %639 = vmatmul.f32.gmra.mxu0 %v575
        %v640 = vpop.f32.mrf.mxu0
        %v641 = vadd.f32 %v603, %v640
        %642 = vmatmul.f32.gmra.mxu0 %v576
        %v643 = vpop.f32.mrf.mxu0
        %v644 = vadd.f32 %v603, %v643
        %645 = vmatmul.f32.gmra.mxu0 %v577
        %v646 = vpop.f32.mrf.mxu0
        %v647 = vadd.f32 %v603, %v646
        %648 = vmatmul.f32.gmra.mxu0 %v578
        %v649 = vpop.f32.mrf.mxu0
        %v650 = vadd.f32 %v603, %v649
        %651 = vmatmul.f32.gmra.mxu0 %v579
        %v652 = vpop.f32.mrf.mxu0
        %v653 = vadd.f32 %v603, %v652
        %654 = vmatmul.f32.gmra.mxu0 %v580
        %v655 = vpop.f32.mrf.mxu0
        %v656 = vadd.f32 %v603, %v655
        %657 = vmatmul.f32.gmra.mxu0 %v581
        %v658 = vpop.f32.mrf.mxu0
        %v659 = vadd.f32 %v603, %v658
        %660 = vmatmul.f32.gmra.mxu0 %v582
        %v661 = vpop.f32.mrf.mxu0
        %v662 = vadd.f32 %v603, %v661
        %663 = vmatmul.f32.gmra.mxu0 %v583
        %v664 = vpop.f32.mrf.mxu0
        %v665 = vadd.f32 %v603, %v664
        %666 = vmatmul.f32.gmra.mxu0 %v584
        %v667 = vpop.f32.mrf.mxu0
        %v668 = vadd.f32 %v603, %v667
        %669 = vdwg.mxu0
        %670 = vmax.xlane.f32.xlu0 %v623
        %v671 = vpop.xlane.xlu0 %670
        %672 = vmax.xlane.f32.xlu0 %v626
        %v673 = vpop.xlane.xlu0 %672
        %674 = vmax.xlane.f32.xlu0 %v629
        %v675 = vpop.xlane.xlu0 %674
        %676 = vmax.xlane.f32.xlu0 %v632
        %v677 = vpop.xlane.xlu0 %676
        %678 = vmax.xlane.f32.xlu0 %v635
        %v679 = vpop.xlane.xlu0 %678
        %680 = vmax.xlane.f32.xlu0 %v638
        %v681 = vpop.xlane.xlu0 %680
        %682 = vmax.xlane.f32.xlu0 %v641
        %v683 = vpop.xlane.xlu0 %682
        %684 = vmax.xlane.f32.xlu0 %v644
        %v685 = vpop.xlane.xlu0 %684
        %686 = vmax.xlane.f32.xlu0 %v647
        %v687 = vpop.xlane.xlu0 %686
        %688 = vmax.xlane.f32.xlu0 %v650
        %v689 = vpop.xlane.xlu0 %688
        %690 = vmax.xlane.f32.xlu0 %v653
        %v691 = vpop.xlane.xlu0 %690
        %692 = vmax.xlane.f32.xlu0 %v656
        %v693 = vpop.xlane.xlu0 %692
        %694 = vmax.xlane.f32.xlu0 %v659
        %v695 = vpop.xlane.xlu0 %694
        %696 = vmax.xlane.f32.xlu0 %v662
        %v697 = vpop.xlane.xlu0 %696
        %698 = vmax.xlane.f32.xlu0 %v665
        %v699 = vpop.xlane.xlu0 %698
        %700 = vmax.xlane.f32.xlu0 %v668
        %v701 = vpop.xlane.xlu0 %700
        %v702 = vsub.f32 %v623, %v671
        %v703 = vsub.f32 %v626, %v673
        %v704 = vsub.f32 %v629, %v675
        %v705 = vsub.f32 %v632, %v677
        %v706 = vsub.f32 %v635, %v679
        %v707 = vsub.f32 %v638, %v681
        %v708 = vsub.f32 %v641, %v683
        %v709 = vsub.f32 %v644, %v685
        %v710 = vsub.f32 %v647, %v687
        %v711 = vsub.f32 %v650, %v689
        %v712 = vsub.f32 %v653, %v691
        %v713 = vsub.f32 %v656, %v693
        %v714 = vsub.f32 %v659, %v695
        %v715 = vsub.f32 %v662, %v697
        %v716 = vsub.f32 %v665, %v699
        %v717 = vsub.f32 %v668, %v701
        %v718 = vmul.f32 %v702, 1.442695
        %v719 = vpow.pop %v718
        %v720 = vmul.f32 %v703, 1.442695
        %v721 = vpow.pop %v720
        %v722 = vmul.f32 %v704, 1.442695
        %v723 = vpow.pop %v722
        %v724 = vmul.f32 %v705, 1.442695
        %v725 = vpow.pop %v724
        %v726 = vmul.f32 %v706, 1.442695
        %v727 = vpow.pop %v726
        %v728 = vmul.f32 %v707, 1.442695
        %v729 = vpow.pop %v728
        %v730 = vmul.f32 %v708, 1.442695
        %v731 = vpow.pop %v730
        %v732 = vmul.f32 %v709, 1.442695
        %v733 = vpow.pop %v732
        %v734 = vmul.f32 %v710, 1.442695
        %v735 = vpow.pop %v734
        %v736 = vmul.f32 %v711, 1.442695
        %v737 = vpow.pop %v736
        %v738 = vmul.f32 %v712, 1.442695
        %v739 = vpow.pop %v738
        %v740 = vmul.f32 %v713, 1.442695
        %v741 = vpow.pop %v740
        %v742 = vmul.f32 %v714, 1.442695
        %v743 = vpow.pop %v742
        %v744 = vmul.f32 %v715, 1.442695
        %v745 = vpow.pop %v744
        %v746 = vmul.f32 %v716, 1.442695
        %v747 = vpow.pop %v746
        %v748 = vmul.f32 %v717, 1.442695
        %v749 = vpow.pop %v748
        %750 = vadd.xlane.f32.xlu0 %v719
        %v751 = vpop.xlane.xlu0 %750
        %752 = vadd.xlane.f32.xlu0 %v721
        %v753 = vpop.xlane.xlu0 %752
        %754 = vadd.xlane.f32.xlu0 %v723
        %v755 = vpop.xlane.xlu0 %754
        %756 = vadd.xlane.f32.xlu0 %v725
        %v757 = vpop.xlane.xlu0 %756
        %758 = vadd.xlane.f32.xlu0 %v727
        %v759 = vpop.xlane.xlu0 %758
        %760 = vadd.xlane.f32.xlu0 %v729
        %v761 = vpop.xlane.xlu0 %760
        %762 = vadd.xlane.f32.xlu0 %v731
        %v763 = vpop.xlane.xlu0 %762
        %764 = vadd.xlane.f32.xlu0 %v733
        %v765 = vpop.xlane.xlu0 %764
        %766 = vadd.xlane.f32.xlu0 %v735
        %v767 = vpop.xlane.xlu0 %766
        %768 = vadd.xlane.f32.xlu0 %v737
        %v769 = vpop.xlane.xlu0 %768
        %770 = vadd.xlane.f32.xlu0 %v739
        %v771 = vpop.xlane.xlu0 %770
        %772 = vadd.xlane.f32.xlu0 %v741
        %v773 = vpop.xlane.xlu0 %772
        %774 = vadd.xlane.f32.xlu0 %v743
        %v775 = vpop.xlane.xlu0 %774
        %776 = vadd.xlane.f32.xlu0 %v745
        %v777 = vpop.xlane.xlu0 %776
        %778 = vadd.xlane.f32.xlu0 %v747
        %v779 = vpop.xlane.xlu0 %778
        %780 = vadd.xlane.f32.xlu0 %v749
        %v781 = vpop.xlane.xlu0 %780
        %v782 = vlog2.pop %v751
        %v783 = vmul.f32 %v782, 0.6931472
        %v784 = vlog2.pop %v753
        %v785 = vmul.f32 %v784, 0.6931472
        %v786 = vlog2.pop %v755
        %v787 = vmul.f32 %v786, 0.6931472
        %v788 = vlog2.pop %v757
        %v789 = vmul.f32 %v788, 0.6931472
        %v790 = vlog2.pop %v759
        %v791 = vmul.f32 %v790, 0.6931472
        %v792 = vlog2.pop %v761
        %v793 = vmul.f32 %v792, 0.6931472
        %v794 = vlog2.pop %v763
        %v795 = vmul.f32 %v794, 0.6931472
        %v796 = vlog2.pop %v765
        %v797 = vmul.f32 %v796, 0.6931472
        %v798 = vlog2.pop %v767
        %v799 = vmul.f32 %v798, 0.6931472
        %v800 = vlog2.pop %v769
        %v801 = vmul.f32 %v800, 0.6931472
        %v802 = vlog2.pop %v771
        %v803 = vmul.f32 %v802, 0.6931472
        %v804 = vlog2.pop %v773
        %v805 = vmul.f32 %v804, 0.6931472
        %v806 = vlog2.pop %v775
        %v807 = vmul.f32 %v806, 0.6931472
        %v808 = vlog2.pop %v777
        %v809 = vmul.f32 %v808, 0.6931472
        %v810 = vlog2.pop %v779
        %v811 = vmul.f32 %v810, 0.6931472
        %v812 = vlog2.pop %v781
        %v813 = vmul.f32 %v812, 0.6931472
        %v814 = vsub.f32 %v702, %v783
        %v815 = vsub.f32 %v703, %v785
        %v816 = vsub.f32 %v704, %v787
        %v817 = vsub.f32 %v705, %v789
        %v818 = vsub.f32 %v706, %v791
        %v819 = vsub.f32 %v707, %v793
        %v820 = vsub.f32 %v708, %v795
        %v821 = vsub.f32 %v709, %v797
        %v822 = vsub.f32 %v710, %v799
        %v823 = vsub.f32 %v711, %v801
        %v824 = vsub.f32 %v712, %v803
        %v825 = vsub.f32 %v713, %v805
        %v826 = vsub.f32 %v714, %v807
        %v827 = vsub.f32 %v715, %v809
        %v828 = vsub.f32 %v716, %v811
        %v829 = vsub.f32 %v717, %v813
        %830 = vst [vmem:[%s218] sm:$0xff] %v814
        %831 = vst [vmem:[%s218 + $0x8] sm:$0xff] %v815
        %832 = vst [vmem:[%s218 + $0x10] sm:$0xff] %v816
        %833 = vst [vmem:[%s218 + $0x18] sm:$0xff] %v817
        %834 = vst [vmem:[%s218 + $0x20] sm:$0xff] %v818
        %835 = vst [vmem:[%s218 + $0x28] sm:$0xff] %v819
        %836 = vst [vmem:[%s218 + $0x30] sm:$0xff] %v820
        %837 = vst [vmem:[%s218 + $0x38] sm:$0xff] %v821
        %838 = vst [vmem:[%s218 + $0x40] sm:$0xff] %v822
        %839 = vst [vmem:[%s218 + $0x48] sm:$0xff] %v823
        %840 = vst [vmem:[%s218 + $0x50] sm:$0xff] %v824
        %841 = vst [vmem:[%s218 + $0x58] sm:$0xff] %v825
        %842 = vst [vmem:[%s218 + $0x60] sm:$0xff] %v826
        %843 = vst [vmem:[%s218 + $0x68] sm:$0xff] %v827
        %844 = vst [vmem:[%s218 + $0x70] sm:$0xff] %v828
        %845 = vst [vmem:[%s218 + $0x78] sm:$0xff] %v829
        %s846 = sand.u32 %s137, 1
        %s847 = scalar_lea.sflag [#allocation3], %s846
        %s848 = sand.u32 %s137, 1
        %s849 = smul.addr %s848, 128
        %s850 = scalar_lea.vmem [#allocation2], %s849
        // Predicated region
        $region41: #{tpu_custom_call.1} parent=39 // pred_check
          %p851 = pneg %p147
        $region42: #{tpu_custom_call.1} parent=39 // pred_check_branch
          %853 = sbr.rel (%p851) target = $region44
        $region43: #{tpu_custom_call.1} parent=39 // pred_region
          %s854 = smul.u32 16, %s19
          %856 = vsyncadd %s847, 0
          %s857 = smul.addr %s854, 8
          %s858 = scalar_lea.hbm %s5, %s857
          %s859 = sshll.u32 %s850, 4
          %s860 = int_to_ptr.vmem [resolvable:$true] %s859
          %s861 = sshll.u32 %s858, 4
          %s862 = int_to_ptr.hbm [resolvable:$true] %s861
          %867 = dma.vmem_to_hbm [thread:$0]  %s860, 2048, %s862, %s847, 128, 128, 8
        $region44: #{tpu_custom_call.1} parent=39 // pred_fallthru
          _
      $region40: #{tpu_custom_call.1} parent=5 // pred_fallthru
        _
      %p868 = scmp.le.s32.totalorder 2, %s14
      // Predicated region
      $region45: #{tpu_custom_call.1} parent=5 // pred_check
        %p869 = pneg %p868
      $region46: #{tpu_custom_call.1} parent=5 // pred_check_branch
        %871 = sbr.rel (%p869) target = $region48
      $region47: #{tpu_custom_call.1} parent=5 // pred_region
        %s872 = ssub.s32 %s14, 2
        // Predicated region
        $region49: #{tpu_custom_call.1} parent=47 // pred_check
          %p873 = pneg %p153
        $region50: #{tpu_custom_call.1} parent=47 // pred_check_branch
          %875 = sbr.rel (%p873) target = $region52
        $region51: #{tpu_custom_call.1} parent=47 // pred_region
          %s876 = sand.u32 %s138, 1
          %s877 = scalar_lea.sflag [#allocation3], %s876
          %s878 = sand.u32 %s138, 1
          %s879 = smul.addr %s878, 128
          %s880 = scalar_lea.vmem [#allocation2], %s879
          %882 = dma.done %s877, 2048
        $region52: #{tpu_custom_call.1} parent=47 // pred_fallthru
          _
      $region48: #{tpu_custom_call.1} parent=5 // pred_fallthru
        _
    $region6: #{tpu_custom_call.1} parent=1 // loop_footer
      %s18 = sadd.s32 1, %s14
    $region7: #{tpu_custom_call.1} parent=1 // loop_footer_branch
      %13 = sbr.rel target = $region3
    $region8: #{tpu_custom_call.1} parent=1 // loop_exit
      _
    %883 = vsyncpa [#allocation3], 1
    %s884 = scalar_lea.sflag [#allocation3], 1
    %885 = vsyncpa %s884, 1

</llo_original>
